<compile_context>
chip_gen: v7x
topology: tpu7x:2x2x1
jax: 0.10.0
libtpu: 0.0.40
codegen_flags: <defaults>
</compile_context>

<pallas_src>
import functools
import math

import numpy as np
import jax
import jax.numpy as jnp
from jax.experimental import pallas as pl
from jax.experimental.pallas import tpu as pltpu

_TWO_PI = 2.0 * math.pi


# ----------------------------------------------------------------------------
# Kernels
# ----------------------------------------------------------------------------
def _kernel_phase(x_ref, w_ref, p_ref, o_ref):
    # x:(TB,TF,1)  w:(1,TF,D) (pre-scaled by 2*pi, duplicated)  p:(1,1,D)
    # o:(TB,TF,D); lanes [0,H) get phase 0 (sin), lanes [H,D) phase pi/2 (cos).
    o_ref[...] = jnp.sin(x_ref[...] * w_ref[...] + p_ref[...]).astype(o_ref.dtype)


def _kernel_split(x_ref, w_ref, o_ref, *, half_dim):
    # x:(TB,TF,1)  w:(1,TF,H) (pre-scaled by 2*pi)  o:(TB,TF,2H), H % 128 == 0
    freqs = x_ref[...] * w_ref[...]                       # (TB, TF, H)
    o_ref[:, :, :half_dim] = jnp.sin(freqs).astype(o_ref.dtype)
    o_ref[:, :, half_dim:] = jnp.cos(freqs).astype(o_ref.dtype)


# ----------------------------------------------------------------------------
# Tiling policy
# ----------------------------------------------------------------------------
def _round_up(v, m):
    return ((v + m - 1) // m) * m


def _choose_tiles(Bp, F, D, w_lanes, out_itemsize, vmem_budget):
    """Largest (TB, TF) that divide (Bp, F) and keep double-buffered blocks
    inside `vmem_budget`."""
    def block_bytes(tb, tf):
        tf_pad = max(8, _round_up(tf, 8))
        out_b = tb * tf * D * out_itemsize * 2        # double-buffered output
        x_b = tb * tf_pad * 128 * 4 * 2               # (TB,TF,1) lane-padded x
        w_b = tf_pad * w_lanes * 4 * 2                # weights (+ phase) blocks
        return out_b + x_b + w_b

    tb_cands = sorted({t for t in range(8, Bp + 1, 8) if Bp % t == 0} | {Bp},
                      reverse=True)
    tf_cands = sorted({F} | {t for t in range(8, F, 8) if F % t == 0},
                      reverse=True)
    best = None
    for tf in tf_cands:
        for tb in tb_cands:
            if block_bytes(tb, tf) <= vmem_budget and (
                    best is None or tb * tf > best[0] * best[1]):
                best = (tb, tf)
    if best is None:                       # degenerate: fall back to smallest
        best = (tb_cands[-1], tf_cands[-1])
    return best


# ----------------------------------------------------------------------------
# Wrapper
# ----------------------------------------------------------------------------
def positional_embedder(x, weights, *, out_dtype=None,
                        vmem_block_budget=16 * 1024 * 1024):
    """Fourier positional embedding, fused in a single Pallas TPU kernel.

    x:        (B, F) float32
    weights:  (1, F, half_dim) float32 (same layout as the torch nn.Parameter)
    out_dtype: output dtype (default x.dtype). Pass jnp.bfloat16 to halve the
               HBM write traffic if the consumer tolerates it.
    returns   (B, F, 2*half_dim)
    """
    B, F = x.shape
    one, Fw, H = weights.shape
    assert one == 1 and Fw == F, "weights must be (1, num_features, half_dim)"
    D = 2 * H
    out_dtype = x.dtype if out_dtype is None else jnp.dtype(out_dtype)
    out_isz = jnp.dtype(out_dtype).itemsize

    split_path = (H % 128 == 0)
    w_lanes = H if split_path else D

    # Pad batch only to the f32 sublane multiple; tiles divide the padded sizes.
    Bp = _round_up(max(B, 1), 8)
    TB, TF = _choose_tiles(Bp, F, D, w_lanes, out_isz, vmem_block_budget)

    # v7x has two TensorCores: give non-trivial single-block problems >=2 steps.
    if Bp // TB == 1 and F // TF == 1 and Bp * F * D * out_isz > (1 << 20):
        halves = [t for t in range(8, Bp // 2 + 1, 8) if Bp % t == 0]
        if halves:
            TB = max(halves)

    if Bp != B:
        x = jnp.pad(x, ((0, Bp - B), (0, 0)))
    # x is delivered per block as (TB, TF, 1): the trailing size-1 dim makes the
    # in-kernel broadcast against the weights a plain size-1 lane broadcast
    # (the lane padding of this small block is accounted for in _choose_tiles).
    x3 = x.reshape(Bp, F, 1)

    w32 = weights.astype(jnp.float32)
    nf, nb = F // TF, Bp // TB
    grid = (nf, nb)                                   # batch tiles innermost

    cost = pl.CostEstimate(
        flops=2 * Bp * F * D,
        transcendentals=Bp * F * D,
        bytes_accessed=Bp * F * 4 + F * w_lanes * 4 + Bp * F * D * out_isz,
    )
    cparams = pltpu.CompilerParams(
        dimension_semantics=("parallel", "parallel"),
        vmem_limit_bytes=32 * 1024 * 1024,
    )
    out_shape = jax.ShapeDtypeStruct((Bp, F, D), out_dtype)
    x_spec = pl.BlockSpec((TB, TF, 1), lambda j, i: (i, j, 0))
    o_spec = pl.BlockSpec((TB, TF, D), lambda j, i: (i, j, 0))

    if split_path:
        w_prep = w32 * _TWO_PI                                      # (1, F, H)
        out = pl.pallas_call(
            functools.partial(_kernel_split, half_dim=H),
            out_shape=out_shape,
            grid=grid,
            in_specs=[x_spec,
                      pl.BlockSpec((1, TF, H), lambda j, i: (0, j, 0))],
            out_specs=o_spec,
            compiler_params=cparams,
            cost_estimate=cost,
        )(x3, w_prep)
    else:
        # Duplicate weights to the full output width and use sin(t + pi/2) ==
        # cos(t): a single lane-dense transcendental pass, no concat/select.
        w_prep = jnp.concatenate([w32, w32], axis=-1) * _TWO_PI     # (1, F, D)
        phase = jnp.concatenate(
            [jnp.zeros((1, 1, H), jnp.float32),
             jnp.full((1, 1, H), 0.5 * math.pi, jnp.float32)], axis=-1)
        out = pl.pallas_call(
            _kernel_phase,
            out_shape=out_shape,
            grid=grid,
            in_specs=[x_spec,
                      pl.BlockSpec((1, TF, D), lambda j, i: (0, j, 0)),
                      pl.BlockSpec((1, 1, D), lambda j, i: (0, 0, 0))],
            out_specs=o_spec,
            compiler_params=cparams,
            cost_estimate=cost,
        )(x3, w_prep, phase)

    return out[:B] if Bp != B else out


# ----------------------------------------------------------------------------
# Pure-JAX reference + parameter init (mimics nn.init.trunc_normal_)
# ----------------------------------------------------------------------------
def positional_embedder_ref(x, weights):
    freqs = x[:, :, None] * weights * _TWO_PI
    return jnp.concatenate([jnp.sin(freqs), jnp.cos(freqs)], axis=-1)


def init_weights(key, num_features, half_dim, sigma=0.01):
    # trunc_normal_(mean=0, std=sigma, a=-3*sigma, b=3*sigma)
    w = jax.random.truncated_normal(
        key, -3.0, 3.0, (1, num_features, half_dim), jnp.float32)
    return w * sigma


# ----------------------------------------------------------------------------
# Demo
# ----------------------------------------------------------------------------
if __name__ == "__main__":
    def run_case(key, B, num_features, dim):
        half_dim = dim // 2
        kw, kx = jax.random.split(key)
        weights = init_weights(kw, num_features, half_dim, sigma=0.01)
        x = jax.random.normal(kx, (B, num_features), jnp.float32)
        out = jax.jit(positional_embedder)(x, weights)
        jax.block_until_ready(out)
        assert out.shape == (B, num_features, dim)
        ref = positional_embedder_ref(x, weights)
        np.testing.assert_allclose(np.asarray(out), np.asarray(ref),
                                   atol=1e-5, rtol=1e-5)

    key = jax.random.PRNGKey(0)
    k1, k2, k3 = jax.random.split(key, 3)
    # H=64 (not a multiple of 128) -> lane-dense phase path; B=6 exercises padding.
    run_case(k1, B=6, num_features=8, dim=128)
    # H=128 -> split path (two aligned stores); F=5 exercises non-8 feature count.
    run_case(k2, B=12, num_features=5, dim=256)
    # Larger batch -> multi-step pipelined grid + padded-batch slicing.
    run_case(k3, B=130, num_features=16, dim=128)
    print("KERNEL_OK")
</pallas_src>

<mosaic_0001>
module attributes {stable_mosaic.version = 11 : i64} {
  func.func @_kernel_phase(%arg0: i32, %arg1: i32, %arg2: memref<8x8x1xf32, #tpu.memory_space<vmem>>, %arg3: memref<1x8x128xf32, #tpu.memory_space<vmem>>, %arg4: memref<1x1x128xf32, #tpu.memory_space<vmem>>, %arg5: memref<8x8x128xf32, #tpu.memory_space<vmem>>) attributes {dimension_semantics = [#tpu.dimension_semantics<parallel>, #tpu.dimension_semantics<parallel>], iteration_bounds = array<i64: 1, 1>, scalar_prefetch = 0 : i64, scratch_operands = 0 : i64, tpu.core_type = #tpu.core_type<tc>, window_params = [{transform_indices = @transform_0, window_bounds = array<i64: 8, 8, 1>}, {transform_indices = @transform_1, window_bounds = array<i64: 1, 8, 128>}, {pipeline_mode = #tpu.pipeline_mode<synchronous>, transform_indices = @transform_2, window_bounds = array<i64: 1, 1, 128>}, {transform_indices = @transform_3, window_bounds = array<i64: 8, 8, 128>}]} {
    %c0 = arith.constant 0 : index
    %c0_0 = arith.constant 0 : index
    %c0_1 = arith.constant 0 : index
    %0 = vector.load %arg2[%c0, %c0_0, %c0_1] : memref<8x8x1xf32, #tpu.memory_space<vmem>>, vector<8x8x1xf32>
    %c0_2 = arith.constant 0 : index
    %c0_3 = arith.constant 0 : index
    %c0_4 = arith.constant 0 : index
    %1 = vector.load %arg3[%c0_2, %c0_3, %c0_4] : memref<1x8x128xf32, #tpu.memory_space<vmem>>, vector<1x8x128xf32>
    %2 = vector.broadcast %0 : vector<8x8x1xf32> to vector<8x8x128xf32>
    %3 = vector.broadcast %1 : vector<1x8x128xf32> to vector<8x8x128xf32>
    %4 = arith.mulf %2, %3 : vector<8x8x128xf32>
    %c0_5 = arith.constant 0 : index
    %c0_6 = arith.constant 0 : index
    %c0_7 = arith.constant 0 : index
    %5 = vector.load %arg4[%c0_5, %c0_6, %c0_7] : memref<1x1x128xf32, #tpu.memory_space<vmem>>, vector<1x1x128xf32>
    %6 = vector.broadcast %5 : vector<1x1x128xf32> to vector<8x8x128xf32>
    %7 = arith.addf %4, %6 : vector<8x8x128xf32>
    %8 = math.sin %7 : vector<8x8x128xf32>
    %c0_8 = arith.constant 0 : index
    %c0_9 = arith.constant 0 : index
    %c0_10 = arith.constant 0 : index
    %9 = vector.load %arg5[%c0_8, %c0_9, %c0_10] : memref<8x8x128xf32, #tpu.memory_space<vmem>>, vector<8x8x128xf32>
    tpu.vector_store %arg5[%c0_8, %c0_9, %c0_10], %8 {strides = array<i32>} : memref<8x8x128xf32, #tpu.memory_space<vmem>>, vector<8x8x128xf32>,
    return
  }
  func.func @transform_0(%arg0: i32, %arg1: i32) -> (i32, i32, i32) {
    %c0_i32 = arith.constant 0 : i32
    %c0_i32_0 = arith.constant 0 : i32
    return %arg1, %arg0, %c0_i32 : i32, i32, i32
  }
  func.func @transform_1(%arg0: i32, %arg1: i32) -> (i32, i32, i32) {
    %c0_i32 = arith.constant 0 : i32
    %c0_i32_0 = arith.constant 0 : i32
    %c0_i32_1 = arith.constant 0 : i32
    return %c0_i32, %arg0, %c0_i32_0 : i32, i32, i32
  }
  func.func @transform_2(%arg0: i32, %arg1: i32) -> (i32, i32, i32) {
    %c0_i32 = arith.constant 0 : i32
    %c0_i32_0 = arith.constant 0 : i32
    %c0_i32_1 = arith.constant 0 : i32
    %c0_i32_2 = arith.constant 0 : i32
    return %c0_i32, %c0_i32_0, %c0_i32_1 : i32, i32, i32
  }
  func.func @transform_3(%arg0: i32, %arg1: i32) -> (i32, i32, i32) {
    %c0_i32 = arith.constant 0 : i32
    %c0_i32_0 = arith.constant 0 : i32
    return %arg1, %arg0, %c0_i32 : i32, i32, i32
  }
}

</mosaic_0001>

<llo_original>
// kernel: positional_embedder.1
$region0: #{positional_embedder.1}
  #allocation0 [shape = 'u32[]', space=smem, size = 0x4, offset = 0x4, fixed_abs, tag = 'smem constant byte address 0x4 - core index']
  #allocation1 [shape = 'u32[144,128]{1,0:T(1,128)}', space=vmem, size = 0x12000, scoped, tag = 'internal scratch']
  %s0 = inlined_call_operand.vmem [shape: f32[8,8,1], index: 0, kind: input, shape index: {}]
  %s1 = inlined_call_operand.vmem [shape: f32[1,8,128], index: 1, kind: input, shape index: {}]
  %s2 = inlined_call_operand.vmem [shape: f32[1,1,128], index: 2, kind: input, shape index: {}]
  %s3 = inlined_call_operand.vmem [shape: f32[8,8,128], index: 3, kind: output, shape index: {}]
  %s4 = sld [smem:[#allocation0]]
  $region22: #{positional_embedder.1} parent=0
    _
  %s6 = ssub.s32 1, %s4
  %s7 = scalar_select 0, %s6, %s4
  // Predicated region
  $region2: #{positional_embedder.1} parent=0 // pred_check
    _
  $region3: #{positional_embedder.1} parent=0 // pred_check_branch
    %9 = sbr.rel (0) target = $region5
  $region4: #{positional_embedder.1} parent=0 // pred_region
    _
  $region5: #{positional_embedder.1} parent=0 // pred_fallthru
    _
  // Predicated region
  $region6: #{positional_embedder.1} parent=0 // pred_check
    _
  $region7: #{positional_embedder.1} parent=0 // pred_check_branch
    %11 = sbr.rel (0) target = $region9
  $region8: #{positional_embedder.1} parent=0 // pred_region
    _
  $region9: #{positional_embedder.1} parent=0 // pred_fallthru
    _
  // Predicated region
  $region10: #{positional_embedder.1} parent=0 // pred_check
    _
  $region11: #{positional_embedder.1} parent=0 // pred_check_branch
    %13 = sbr.rel (0) target = $region13
  $region12: #{positional_embedder.1} parent=0 // pred_region
    _
  $region13: #{positional_embedder.1} parent=0 // pred_fallthru
    _
  %v14 = vld [vmem:[%s0] sm:$0xff]
  %v15 = vld [vmem:[%s0 + $0x8] sm:$0xff]
  %v16 = vld [vmem:[%s0 + $0x10] sm:$0xff]
  %v17 = vld [vmem:[%s0 + $0x18] sm:$0xff]
  %v18 = vld [vmem:[%s0 + $0x20] sm:$0xff]
  %v19 = vld [vmem:[%s0 + $0x28] sm:$0xff]
  %v20 = vld [vmem:[%s0 + $0x30] sm:$0xff]
  %v21 = vld [vmem:[%s0 + $0x38] sm:$0xff]
  %v22 = vld [vmem:[%s1] sm:$0xff]
  %24 = vset.pattern.permute.xlu0 0
  %25 = vperm.xlu0 %24, %v14
  %v26 = vpop.permute.xlu0 %25
  %29 = vset.pattern.permute.xlu0 0
  %30 = vperm.xlu0 %29, %v15
  %v31 = vpop.permute.xlu0 %30
  %34 = vset.pattern.permute.xlu0 0
  %35 = vperm.xlu0 %34, %v16
  %v36 = vpop.permute.xlu0 %35
  %39 = vset.pattern.permute.xlu0 0
  %40 = vperm.xlu0 %39, %v17
  %v41 = vpop.permute.xlu0 %40
  %44 = vset.pattern.permute.xlu0 0
  %45 = vperm.xlu0 %44, %v18
  %v46 = vpop.permute.xlu0 %45
  %49 = vset.pattern.permute.xlu0 0
  %50 = vperm.xlu0 %49, %v19
  %v51 = vpop.permute.xlu0 %50
  %54 = vset.pattern.permute.xlu0 0
  %55 = vperm.xlu0 %54, %v20
  %v56 = vpop.permute.xlu0 %55
  %59 = vset.pattern.permute.xlu0 0
  %60 = vperm.xlu0 %59, %v21
  %v61 = vpop.permute.xlu0 %60
  %v63 = vmul.f32 %v26, %v22
  %v64 = vmul.f32 %v31, %v22
  %v65 = vmul.f32 %v36, %v22
  %v66 = vmul.f32 %v41, %v22
  %v67 = vmul.f32 %v46, %v22
  %v68 = vmul.f32 %v51, %v22
  %v69 = vmul.f32 %v56, %v22
  %v70 = vmul.f32 %v61, %v22
  %v71 = vld [vmem:[%s2] sm:$0x1]
  %v73 = vlaneseq
  %v74 = vshrl.u32 %v73, 7
  %v75 = vsub.s32 0, %v74
  %v76 = vrot.slane %v71, %v75
  %v78 = vadd.f32 %v63, %v76
  %v79 = vadd.f32 %v64, %v76
  %v80 = vadd.f32 %v65, %v76
  %v81 = vadd.f32 %v66, %v76
  %v82 = vadd.f32 %v67, %v76
  %v83 = vadd.f32 %v68, %v76
  %v84 = vadd.f32 %v69, %v76
  %v85 = vadd.f32 %v70, %v76
  %v86 = vand.u32 2147483647, %v78
  %vm87 = vcmp.le.f32.partialorder %v86, 0.7853982
  %vm88 = vcmp.lt.s32.totalorder %v78, 0
  %v89 = vand.u32 %v78, 2139095040
  %v90 = vshrl.u32 %v89, 23
  %v91 = vsub.s32 %v90, 127
  %v92 = vand.u32 2147483647, %v78
  %v93 = vand.u32 %v92, 8388607
  %v94 = vor.u32 %v93, 8388608
  %v95 = vsub.s32 0, %v94
  %v96 = vadd.s32 %v91, 1
  %vm97 = vcmp.gt.s32.totalorder %v96, 0
  %v98 = vsel %vm97, %v96, 0
  %v99 = vshrl.u32 %v98, 5
  %v100 = vand.u32 %v98, 31
  %v101 = vsub.s32 32, %v100
  %v102 = vshrl.u32 683565275, %v101
  %v103 = vshll.u32 683565275, %v100
  %v104 = vshrl.u32 2475754826, %v101
  %v105 = vor.u32 %v103, %v104
  %v106 = vshll.u32 2475754826, %v100
  %v107 = vshrl.u32 2131351028, %v101
  %v108 = vor.u32 %v106, %v107
  %v109 = vshll.u32 2131351028, %v100
  %v110 = vshrl.u32 2102212464, %v101
  %v111 = vor.u32 %v109, %v110
  %v112 = vshll.u32 2102212464, %v100
  %v113 = vshrl.u32 920167782, %v101
  %v114 = vor.u32 %v112, %v113
  %v115 = vshll.u32 920167782, %v100
  %v116 = vshrl.u32 1326507024, %v101
  %v117 = vor.u32 %v115, %v116
  %vm118 = vcmp.lt.s32.totalorder %v99, 1
  %vm119 = vcmp.lt.s32.totalorder %v99, 2
  %vm120 = vcmp.lt.s32.totalorder %v99, 3
  %vm121 = vcmp.lt.s32.totalorder %v99, 4
  %v122 = vsel %vm118, %v102, %v105
  %v123 = vsel %vm121, %v111, 2102212464
  %v124 = vsel %vm120, %v108, %v123
  %v125 = vsel %vm119, %v122, %v124
  %v126 = vsel %vm118, %v105, %v108
  %v127 = vsel %vm121, %v114, 920167782
  %v128 = vsel %vm120, %v111, %v127
  %v129 = vsel %vm119, %v126, %v128
  %v130 = vsel %vm118, %v108, %v111
  %v131 = vsel %vm121, %v117, 1326507024
  %v132 = vsel %vm120, %v114, %v131
  %v133 = vsel %vm119, %v130, %v132
  %v134 = vshll.u32 %v94, 8
  %v135 = vmul.u32.u64.compose %v134, %v133
  %v136 = vextract.low.u32 %v135
  %v137 = vextract.high.u32 %v135
  %v138 = vmul.u32.u64.compose %v134, %v129
  %v139 = vextract.low.u32 %v138
  %v140 = vextract.high.u32 %v138
  %v141 = vmul.u32 %v134, %v125
  %v142 = vadd.s32 %v137, %v139
  %vm143 = vc.u32 %v137, %v139
  %v144 = vadd.s32 %v140, 1
  %v145 = vsel %vm143, %v144, %v140
  %v146 = vadd.s32 %v141, %v145
  %v147 = vadd.s32 %v146, 536870912
  %v148 = vshrl.u32 %v147, 30
  %v149 = vshll.u32 %v148, 30
  %v150 = vsub.s32 %v146, %v149
  %vm151 = vcmp.lt.s32.totalorder %v150, 0
  %v152 = vsub.s32 0, %v150
  %v153 = vsel %vm151, %v152, %v150
  %v154 = vclz %v153
  %v155 = vsub.s32 %v154, 2
  %vm156 = vcmp.gt.s32.totalorder 0, %v155
  %v157 = vsel %vm156, 0, %v155
  %v158 = vsub.s32 32, %v157
  %v159 = vshll.u32 %v150, %v157
  %v160 = vshrl.u32 %v142, %v158
  %v161 = vor.u32 %v159, %v160
  %v162 = vsub.s32 4294967266, %v157
  %v163 = vadd.s32 %v162, 127
  %v164 = vshll.u32 %v163, 23
  %v165 = vor.u32 4788187, %v164
  %v166 = vand.u32 2147483647, %v165
  %v168 = vcvt.s32.f32 %v161
  %v169 = vmul.f32 %v168, %v166
  %v170 = vxor.u32 %v169, 2147483648
  %v171 = vsel %vm88, %v170, %v169
  %v172 = vsub.s32 4, %v148
  %v173 = vsel %vm88, %v172, %v148
  %v174 = vsel %vm87, %v78, %v171
  %v175 = vsel %vm87, 0, %v173
  %v176 = vcosq.f32.pop %v174
  %v177 = vsinq.f32.pop %v174
  %vm178 = vweird.f32 %v78
  %v179 = vadd.s32 %v175, 3
  %v180 = vand.u32 %v179, 3
  %vm181 = vcmp.lt.s32.totalorder %v180, 2
  %vm182 = vcmp.eq.s32.totalorder %v180, 0
  %v183 = vxor.u32 %v177, 2147483648
  %v184 = vsel %vm182, %v176, %v183
  %vm185 = vcmp.eq.s32.totalorder %v180, 2
  %v186 = vxor.u32 %v176, 2147483648
  %v187 = vsel %vm185, %v186, %v177
  %v188 = vsel %vm181, %v184, %v187
  %v189 = vsel %vm178, nan, %v188
  %v190 = vand.u32 2147483647, %v79
  %vm191 = vcmp.le.f32.partialorder %v190, 0.7853982
  %vm192 = vcmp.lt.s32.totalorder %v79, 0
  %v193 = vand.u32 %v79, 2139095040
  %v194 = vshrl.u32 %v193, 23
  %v195 = vsub.s32 %v194, 127
  %v196 = vand.u32 2147483647, %v79
  %v197 = vand.u32 %v196, 8388607
  %v198 = vor.u32 %v197, 8388608
  %v199 = vsub.s32 0, %v198
  %v200 = vadd.s32 %v195, 1
  %vm201 = vcmp.gt.s32.totalorder %v200, 0
  %v202 = vsel %vm201, %v200, 0
  %v203 = vshrl.u32 %v202, 5
  %v204 = vand.u32 %v202, 31
  %v205 = vsub.s32 32, %v204
  %v206 = vshrl.u32 683565275, %v205
  %v207 = vshll.u32 683565275, %v204
  %v208 = vshrl.u32 2475754826, %v205
  %v209 = vor.u32 %v207, %v208
  %v210 = vshll.u32 2475754826, %v204
  %v211 = vshrl.u32 2131351028, %v205
  %v212 = vor.u32 %v210, %v211
  %v213 = vshll.u32 2131351028, %v204
  %v214 = vshrl.u32 2102212464, %v205
  %v215 = vor.u32 %v213, %v214
  %v216 = vshll.u32 2102212464, %v204
  %v217 = vshrl.u32 920167782, %v205
  %v218 = vor.u32 %v216, %v217
  %v219 = vshll.u32 920167782, %v204
  %v220 = vshrl.u32 1326507024, %v205
  %v221 = vor.u32 %v219, %v220
  %vm222 = vcmp.lt.s32.totalorder %v203, 1
  %vm223 = vcmp.lt.s32.totalorder %v203, 2
  %vm224 = vcmp.lt.s32.totalorder %v203, 3
  %vm225 = vcmp.lt.s32.totalorder %v203, 4
  %v226 = vsel %vm222, %v206, %v209
  %v227 = vsel %vm225, %v215, 2102212464
  %v228 = vsel %vm224, %v212, %v227
  %v229 = vsel %vm223, %v226, %v228
  %v230 = vsel %vm222, %v209, %v212
  %v231 = vsel %vm225, %v218, 920167782
  %v232 = vsel %vm224, %v215, %v231
  %v233 = vsel %vm223, %v230, %v232
  %v234 = vsel %vm222, %v212, %v215
  %v235 = vsel %vm225, %v221, 1326507024
  %v236 = vsel %vm224, %v218, %v235
  %v237 = vsel %vm223, %v234, %v236
  %v238 = vshll.u32 %v198, 8
  %v239 = vmul.u32.u64.compose %v238, %v237
  %v240 = vextract.low.u32 %v239
  %v241 = vextract.high.u32 %v239
  %v242 = vmul.u32.u64.compose %v238, %v233
  %v243 = vextract.low.u32 %v242
  %v244 = vextract.high.u32 %v242
  %v245 = vmul.u32 %v238, %v229
  %v246 = vadd.s32 %v241, %v243
  %vm247 = vc.u32 %v241, %v243
  %v248 = vadd.s32 %v244, 1
  %v249 = vsel %vm247, %v248, %v244
  %v250 = vadd.s32 %v245, %v249
  %v251 = vadd.s32 %v250, 536870912
  %v252 = vshrl.u32 %v251, 30
  %v253 = vshll.u32 %v252, 30
  %v254 = vsub.s32 %v250, %v253
  %vm255 = vcmp.lt.s32.totalorder %v254, 0
  %v256 = vsub.s32 0, %v254
  %v257 = vsel %vm255, %v256, %v254
  %v258 = vclz %v257
  %v259 = vsub.s32 %v258, 2
  %vm260 = vcmp.gt.s32.totalorder 0, %v259
  %v261 = vsel %vm260, 0, %v259
  %v262 = vsub.s32 32, %v261
  %v263 = vshll.u32 %v254, %v261
  %v264 = vshrl.u32 %v246, %v262
  %v265 = vor.u32 %v263, %v264
  %v266 = vsub.s32 4294967266, %v261
  %v267 = vadd.s32 %v266, 127
  %v268 = vshll.u32 %v267, 23
  %v269 = vor.u32 4788187, %v268
  %v270 = vand.u32 2147483647, %v269
  %v272 = vcvt.s32.f32 %v265
  %v273 = vmul.f32 %v272, %v270
  %v274 = vxor.u32 %v273, 2147483648
  %v275 = vsel %vm192, %v274, %v273
  %v276 = vsub.s32 4, %v252
  %v277 = vsel %vm192, %v276, %v252
  %v278 = vsel %vm191, %v79, %v275
  %v279 = vsel %vm191, 0, %v277
  %v280 = vcosq.f32.pop %v278
  %v281 = vsinq.f32.pop %v278
  %vm282 = vweird.f32 %v79
  %v283 = vadd.s32 %v279, 3
  %v284 = vand.u32 %v283, 3
  %vm285 = vcmp.lt.s32.totalorder %v284, 2
  %vm286 = vcmp.eq.s32.totalorder %v284, 0
  %v287 = vxor.u32 %v281, 2147483648
  %v288 = vsel %vm286, %v280, %v287
  %vm289 = vcmp.eq.s32.totalorder %v284, 2
  %v290 = vxor.u32 %v280, 2147483648
  %v291 = vsel %vm289, %v290, %v281
  %v292 = vsel %vm285, %v288, %v291
  %v293 = vsel %vm282, nan, %v292
  %v294 = vand.u32 2147483647, %v80
  %vm295 = vcmp.le.f32.partialorder %v294, 0.7853982
  %vm296 = vcmp.lt.s32.totalorder %v80, 0
  %v297 = vand.u32 %v80, 2139095040
  %v298 = vshrl.u32 %v297, 23
  %v299 = vsub.s32 %v298, 127
  %v300 = vand.u32 2147483647, %v80
  %v301 = vand.u32 %v300, 8388607
  %v302 = vor.u32 %v301, 8388608
  %v303 = vsub.s32 0, %v302
  %v304 = vadd.s32 %v299, 1
  %vm305 = vcmp.gt.s32.totalorder %v304, 0
  %v306 = vsel %vm305, %v304, 0
  %v307 = vshrl.u32 %v306, 5
  %v308 = vand.u32 %v306, 31
  %v309 = vsub.s32 32, %v308
  %v310 = vshrl.u32 683565275, %v309
  %v311 = vshll.u32 683565275, %v308
  %v312 = vshrl.u32 2475754826, %v309
  %v313 = vor.u32 %v311, %v312
  %v314 = vshll.u32 2475754826, %v308
  %v315 = vshrl.u32 2131351028, %v309
  %v316 = vor.u32 %v314, %v315
  %v317 = vshll.u32 2131351028, %v308
  %v318 = vshrl.u32 2102212464, %v309
  %v319 = vor.u32 %v317, %v318
  %v320 = vshll.u32 2102212464, %v308
  %v321 = vshrl.u32 920167782, %v309
  %v322 = vor.u32 %v320, %v321
  %v323 = vshll.u32 920167782, %v308
  %v324 = vshrl.u32 1326507024, %v309
  %v325 = vor.u32 %v323, %v324
  %vm326 = vcmp.lt.s32.totalorder %v307, 1
  %vm327 = vcmp.lt.s32.totalorder %v307, 2
  %vm328 = vcmp.lt.s32.totalorder %v307, 3
  %vm329 = vcmp.lt.s32.totalorder %v307, 4
  %v330 = vsel %vm326, %v310, %v313
  %v331 = vsel %vm329, %v319, 2102212464
  %v332 = vsel %vm328, %v316, %v331
  %v333 = vsel %vm327, %v330, %v332
  %v334 = vsel %vm326, %v313, %v316
  %v335 = vsel %vm329, %v322, 920167782
  %v336 = vsel %vm328, %v319, %v335
  %v337 = vsel %vm327, %v334, %v336
  %v338 = vsel %vm326, %v316, %v319
  %v339 = vsel %vm329, %v325, 1326507024
  %v340 = vsel %vm328, %v322, %v339
  %v341 = vsel %vm327, %v338, %v340
  %v342 = vshll.u32 %v302, 8
  %v343 = vmul.u32.u64.compose %v342, %v341
  %v344 = vextract.low.u32 %v343
  %v345 = vextract.high.u32 %v343
  %v346 = vmul.u32.u64.compose %v342, %v337
  %v347 = vextract.low.u32 %v346
  %v348 = vextract.high.u32 %v346
  %v349 = vmul.u32 %v342, %v333
  %v350 = vadd.s32 %v345, %v347
  %vm351 = vc.u32 %v345, %v347
  %v352 = vadd.s32 %v348, 1
  %v353 = vsel %vm351, %v352, %v348
  %v354 = vadd.s32 %v349, %v353
  %v355 = vadd.s32 %v354, 536870912
  %v356 = vshrl.u32 %v355, 30
  %v357 = vshll.u32 %v356, 30
  %v358 = vsub.s32 %v354, %v357
  %vm359 = vcmp.lt.s32.totalorder %v358, 0
  %v360 = vsub.s32 0, %v358
  %v361 = vsel %vm359, %v360, %v358
  %v362 = vclz %v361
  %v363 = vsub.s32 %v362, 2
  %vm364 = vcmp.gt.s32.totalorder 0, %v363
  %v365 = vsel %vm364, 0, %v363
  %v366 = vsub.s32 32, %v365
  %v367 = vshll.u32 %v358, %v365
  %v368 = vshrl.u32 %v350, %v366
  %v369 = vor.u32 %v367, %v368
  %v370 = vsub.s32 4294967266, %v365
  %v371 = vadd.s32 %v370, 127
  %v372 = vshll.u32 %v371, 23
  %v373 = vor.u32 4788187, %v372
  %v374 = vand.u32 2147483647, %v373
  %v376 = vcvt.s32.f32 %v369
  %v377 = vmul.f32 %v376, %v374
  %v378 = vxor.u32 %v377, 2147483648
  %v379 = vsel %vm296, %v378, %v377
  %v380 = vsub.s32 4, %v356
  %v381 = vsel %vm296, %v380, %v356
  %v382 = vsel %vm295, %v80, %v379
  %v383 = vsel %vm295, 0, %v381
  %v384 = vcosq.f32.pop %v382
  %v385 = vsinq.f32.pop %v382
  %vm386 = vweird.f32 %v80
  %v387 = vadd.s32 %v383, 3
  %v388 = vand.u32 %v387, 3
  %vm389 = vcmp.lt.s32.totalorder %v388, 2
  %vm390 = vcmp.eq.s32.totalorder %v388, 0
  %v391 = vxor.u32 %v385, 2147483648
  %v392 = vsel %vm390, %v384, %v391
  %vm393 = vcmp.eq.s32.totalorder %v388, 2
  %v394 = vxor.u32 %v384, 2147483648
  %v395 = vsel %vm393, %v394, %v385
  %v396 = vsel %vm389, %v392, %v395
  %v397 = vsel %vm386, nan, %v396
  %v398 = vand.u32 2147483647, %v81
  %vm399 = vcmp.le.f32.partialorder %v398, 0.7853982
  %vm400 = vcmp.lt.s32.totalorder %v81, 0
  %v401 = vand.u32 %v81, 2139095040
  %v402 = vshrl.u32 %v401, 23
  %v403 = vsub.s32 %v402, 127
  %v404 = vand.u32 2147483647, %v81
  %v405 = vand.u32 %v404, 8388607
  %v406 = vor.u32 %v405, 8388608
  %v407 = vsub.s32 0, %v406
  %v408 = vadd.s32 %v403, 1
  %vm409 = vcmp.gt.s32.totalorder %v408, 0
  %v410 = vsel %vm409, %v408, 0
  %v411 = vshrl.u32 %v410, 5
  %v412 = vand.u32 %v410, 31
  %v413 = vsub.s32 32, %v412
  %v414 = vshrl.u32 683565275, %v413
  %v415 = vshll.u32 683565275, %v412
  %v416 = vshrl.u32 2475754826, %v413
  %v417 = vor.u32 %v415, %v416
  %v418 = vshll.u32 2475754826, %v412
  %v419 = vshrl.u32 2131351028, %v413
  %v420 = vor.u32 %v418, %v419
  %v421 = vshll.u32 2131351028, %v412
  %v422 = vshrl.u32 2102212464, %v413
  %v423 = vor.u32 %v421, %v422
  %v424 = vshll.u32 2102212464, %v412
  %v425 = vshrl.u32 920167782, %v413
  %v426 = vor.u32 %v424, %v425
  %v427 = vshll.u32 920167782, %v412
  %v428 = vshrl.u32 1326507024, %v413
  %v429 = vor.u32 %v427, %v428
  %vm430 = vcmp.lt.s32.totalorder %v411, 1
  %vm431 = vcmp.lt.s32.totalorder %v411, 2
  %vm432 = vcmp.lt.s32.totalorder %v411, 3
  %vm433 = vcmp.lt.s32.totalorder %v411, 4
  %v434 = vsel %vm430, %v414, %v417
  %v435 = vsel %vm433, %v423, 2102212464
  %v436 = vsel %vm432, %v420, %v435
  %v437 = vsel %vm431, %v434, %v436
  %v438 = vsel %vm430, %v417, %v420
  %v439 = vsel %vm433, %v426, 920167782
  %v440 = vsel %vm432, %v423, %v439
  %v441 = vsel %vm431, %v438, %v440
  %v442 = vsel %vm430, %v420, %v423
  %v443 = vsel %vm433, %v429, 1326507024
  %v444 = vsel %vm432, %v426, %v443
  %v445 = vsel %vm431, %v442, %v444
  %v446 = vshll.u32 %v406, 8
  %v447 = vmul.u32.u64.compose %v446, %v445
  %v448 = vextract.low.u32 %v447
  %v449 = vextract.high.u32 %v447
  %v450 = vmul.u32.u64.compose %v446, %v441
  %v451 = vextract.low.u32 %v450
  %v452 = vextract.high.u32 %v450
  %v453 = vmul.u32 %v446, %v437
  %v454 = vadd.s32 %v449, %v451
  %vm455 = vc.u32 %v449, %v451
  %v456 = vadd.s32 %v452, 1
  %v457 = vsel %vm455, %v456, %v452
  %v458 = vadd.s32 %v453, %v457
  %v459 = vadd.s32 %v458, 536870912
  %v460 = vshrl.u32 %v459, 30
  %v461 = vshll.u32 %v460, 30
  %v462 = vsub.s32 %v458, %v461
  %vm463 = vcmp.lt.s32.totalorder %v462, 0
  %v464 = vsub.s32 0, %v462
  %v465 = vsel %vm463, %v464, %v462
  %v466 = vclz %v465
  %v467 = vsub.s32 %v466, 2
  %vm468 = vcmp.gt.s32.totalorder 0, %v467
  %v469 = vsel %vm468, 0, %v467
  %v470 = vsub.s32 32, %v469
  %v471 = vshll.u32 %v462, %v469
  %v472 = vshrl.u32 %v454, %v470
  %v473 = vor.u32 %v471, %v472
  %v474 = vsub.s32 4294967266, %v469
  %v475 = vadd.s32 %v474, 127
  %v476 = vshll.u32 %v475, 23
  %v477 = vor.u32 4788187, %v476
  %v478 = vand.u32 2147483647, %v477
  %v480 = vcvt.s32.f32 %v473
  %v481 = vmul.f32 %v480, %v478
  %v482 = vxor.u32 %v481, 2147483648
  %v483 = vsel %vm400, %v482, %v481
  %v484 = vsub.s32 4, %v460
  %v485 = vsel %vm400, %v484, %v460
  %v486 = vsel %vm399, %v81, %v483
  %v487 = vsel %vm399, 0, %v485
  %v488 = vcosq.f32.pop %v486
  %v489 = vsinq.f32.pop %v486
  %vm490 = vweird.f32 %v81
  %v491 = vadd.s32 %v487, 3
  %v492 = vand.u32 %v491, 3
  %vm493 = vcmp.lt.s32.totalorder %v492, 2
  %vm494 = vcmp.eq.s32.totalorder %v492, 0
  %v495 = vxor.u32 %v489, 2147483648
  %v496 = vsel %vm494, %v488, %v495
  %vm497 = vcmp.eq.s32.totalorder %v492, 2
  %v498 = vxor.u32 %v488, 2147483648
  %v499 = vsel %vm497, %v498, %v489
  %v500 = vsel %vm493, %v496, %v499
  %v501 = vsel %vm490, nan, %v500
  %v502 = vand.u32 2147483647, %v82
  %vm503 = vcmp.le.f32.partialorder %v502, 0.7853982
  %vm504 = vcmp.lt.s32.totalorder %v82, 0
  %v505 = vand.u32 %v82, 2139095040
  %v506 = vshrl.u32 %v505, 23
  %v507 = vsub.s32 %v506, 127
  %v508 = vand.u32 2147483647, %v82
  %v509 = vand.u32 %v508, 8388607
  %v510 = vor.u32 %v509, 8388608
  %v511 = vsub.s32 0, %v510
  %v512 = vadd.s32 %v507, 1
  %vm513 = vcmp.gt.s32.totalorder %v512, 0
  %v514 = vsel %vm513, %v512, 0
  %v515 = vshrl.u32 %v514, 5
  %v516 = vand.u32 %v514, 31
  %v517 = vsub.s32 32, %v516
  %v518 = vshrl.u32 683565275, %v517
  %v519 = vshll.u32 683565275, %v516
  %v520 = vshrl.u32 2475754826, %v517
  %v521 = vor.u32 %v519, %v520
  %v522 = vshll.u32 2475754826, %v516
  %v523 = vshrl.u32 2131351028, %v517
  %v524 = vor.u32 %v522, %v523
  %v525 = vshll.u32 2131351028, %v516
  %v526 = vshrl.u32 2102212464, %v517
  %v527 = vor.u32 %v525, %v526
  %v528 = vshll.u32 2102212464, %v516
  %v529 = vshrl.u32 920167782, %v517
  %v530 = vor.u32 %v528, %v529
  %v531 = vshll.u32 920167782, %v516
  %v532 = vshrl.u32 1326507024, %v517
  %v533 = vor.u32 %v531, %v532
  %vm534 = vcmp.lt.s32.totalorder %v515, 1
  %vm535 = vcmp.lt.s32.totalorder %v515, 2
  %vm536 = vcmp.lt.s32.totalorder %v515, 3
  %vm537 = vcmp.lt.s32.totalorder %v515, 4
  %v538 = vsel %vm534, %v518, %v521
  %v539 = vsel %vm537, %v527, 2102212464
  %v540 = vsel %vm536, %v524, %v539
  %v541 = vsel %vm535, %v538, %v540
  %v542 = vsel %vm534, %v521, %v524
  %v543 = vsel %vm537, %v530, 920167782
  %v544 = vsel %vm536, %v527, %v543
  %v545 = vsel %vm535, %v542, %v544
  %v546 = vsel %vm534, %v524, %v527
  %v547 = vsel %vm537, %v533, 1326507024
  %v548 = vsel %vm536, %v530, %v547
  %v549 = vsel %vm535, %v546, %v548
  %v550 = vshll.u32 %v510, 8
  %v551 = vmul.u32.u64.compose %v550, %v549
  %v552 = vextract.low.u32 %v551
  %v553 = vextract.high.u32 %v551
  %v554 = vmul.u32.u64.compose %v550, %v545
  %v555 = vextract.low.u32 %v554
  %v556 = vextract.high.u32 %v554
  %v557 = vmul.u32 %v550, %v541
  %v558 = vadd.s32 %v553, %v555
  %vm559 = vc.u32 %v553, %v555
  %v560 = vadd.s32 %v556, 1
  %v561 = vsel %vm559, %v560, %v556
  %v562 = vadd.s32 %v557, %v561
  %v563 = vadd.s32 %v562, 536870912
  %v564 = vshrl.u32 %v563, 30
  %v565 = vshll.u32 %v564, 30
  %v566 = vsub.s32 %v562, %v565
  %vm567 = vcmp.lt.s32.totalorder %v566, 0
  %v568 = vsub.s32 0, %v566
  %v569 = vsel %vm567, %v568, %v566
  %v570 = vclz %v569
  %v571 = vsub.s32 %v570, 2
  %vm572 = vcmp.gt.s32.totalorder 0, %v571
  %v573 = vsel %vm572, 0, %v571
  %v574 = vsub.s32 32, %v573
  %v575 = vshll.u32 %v566, %v573
  %v576 = vshrl.u32 %v558, %v574
  %v577 = vor.u32 %v575, %v576
  %v578 = vsub.s32 4294967266, %v573
  %v579 = vadd.s32 %v578, 127
  %v580 = vshll.u32 %v579, 23
  %v581 = vor.u32 4788187, %v580
  %v582 = vand.u32 2147483647, %v581
  %v584 = vcvt.s32.f32 %v577
  %v585 = vmul.f32 %v584, %v582
  %v586 = vxor.u32 %v585, 2147483648
  %v587 = vsel %vm504, %v586, %v585
  %v588 = vsub.s32 4, %v564
  %v589 = vsel %vm504, %v588, %v564
  %v590 = vsel %vm503, %v82, %v587
  %v591 = vsel %vm503, 0, %v589
  %v592 = vcosq.f32.pop %v590
  %v593 = vsinq.f32.pop %v590
  %vm594 = vweird.f32 %v82
  %v595 = vadd.s32 %v591, 3
  %v596 = vand.u32 %v595, 3
  %vm597 = vcmp.lt.s32.totalorder %v596, 2
  %vm598 = vcmp.eq.s32.totalorder %v596, 0
  %v599 = vxor.u32 %v593, 2147483648
  %v600 = vsel %vm598, %v592, %v599
  %vm601 = vcmp.eq.s32.totalorder %v596, 2
  %v602 = vxor.u32 %v592, 2147483648
  %v603 = vsel %vm601, %v602, %v593
  %v604 = vsel %vm597, %v600, %v603
  %v605 = vsel %vm594, nan, %v604
  %v606 = vand.u32 2147483647, %v83
  %vm607 = vcmp.le.f32.partialorder %v606, 0.7853982
  %vm608 = vcmp.lt.s32.totalorder %v83, 0
  %v609 = vand.u32 %v83, 2139095040
  %v610 = vshrl.u32 %v609, 23
  %v611 = vsub.s32 %v610, 127
  %v612 = vand.u32 2147483647, %v83
  %v613 = vand.u32 %v612, 8388607
  %v614 = vor.u32 %v613, 8388608
  %v615 = vsub.s32 0, %v614
  %v616 = vadd.s32 %v611, 1
  %vm617 = vcmp.gt.s32.totalorder %v616, 0
  %v618 = vsel %vm617, %v616, 0
  %v619 = vshrl.u32 %v618, 5
  %v620 = vand.u32 %v618, 31
  %v621 = vsub.s32 32, %v620
  %v622 = vshrl.u32 683565275, %v621
  %v623 = vshll.u32 683565275, %v620
  %v624 = vshrl.u32 2475754826, %v621
  %v625 = vor.u32 %v623, %v624
  %v626 = vshll.u32 2475754826, %v620
  %v627 = vshrl.u32 2131351028, %v621
  %v628 = vor.u32 %v626, %v627
  %v629 = vshll.u32 2131351028, %v620
  %v630 = vshrl.u32 2102212464, %v621
  %v631 = vor.u32 %v629, %v630
  %v632 = vshll.u32 2102212464, %v620
  %v633 = vshrl.u32 920167782, %v621
  %v634 = vor.u32 %v632, %v633
  %v635 = vshll.u32 920167782, %v620
  %v636 = vshrl.u32 1326507024, %v621
  %v637 = vor.u32 %v635, %v636
  %vm638 = vcmp.lt.s32.totalorder %v619, 1
  %vm639 = vcmp.lt.s32.totalorder %v619, 2
  %vm640 = vcmp.lt.s32.totalorder %v619, 3
  %vm641 = vcmp.lt.s32.totalorder %v619, 4
  %v642 = vsel %vm638, %v622, %v625
  %v643 = vsel %vm641, %v631, 2102212464
  %v644 = vsel %vm640, %v628, %v643
  %v645 = vsel %vm639, %v642, %v644
  %v646 = vsel %vm638, %v625, %v628
  %v647 = vsel %vm641, %v634, 920167782
  %v648 = vsel %vm640, %v631, %v647
  %v649 = vsel %vm639, %v646, %v648
  %v650 = vsel %vm638, %v628, %v631
  %v651 = vsel %vm641, %v637, 1326507024
  %v652 = vsel %vm640, %v634, %v651
  %v653 = vsel %vm639, %v650, %v652
  %v654 = vshll.u32 %v614, 8
  %v655 = vmul.u32.u64.compose %v654, %v653
  %v656 = vextract.low.u32 %v655
  %v657 = vextract.high.u32 %v655
  %v658 = vmul.u32.u64.compose %v654, %v649
  %v659 = vextract.low.u32 %v658
  %v660 = vextract.high.u32 %v658
  %v661 = vmul.u32 %v654, %v645
  %v662 = vadd.s32 %v657, %v659
  %vm663 = vc.u32 %v657, %v659
  %v664 = vadd.s32 %v660, 1
  %v665 = vsel %vm663, %v664, %v660
  %v666 = vadd.s32 %v661, %v665
  %v667 = vadd.s32 %v666, 536870912
  %v668 = vshrl.u32 %v667, 30
  %v669 = vshll.u32 %v668, 30
  %v670 = vsub.s32 %v666, %v669
  %vm671 = vcmp.lt.s32.totalorder %v670, 0
  %v672 = vsub.s32 0, %v670
  %v673 = vsel %vm671, %v672, %v670
  %v674 = vclz %v673
  %v675 = vsub.s32 %v674, 2
  %vm676 = vcmp.gt.s32.totalorder 0, %v675
  %v677 = vsel %vm676, 0, %v675
  %v678 = vsub.s32 32, %v677
  %v679 = vshll.u32 %v670, %v677
  %v680 = vshrl.u32 %v662, %v678
  %v681 = vor.u32 %v679, %v680
  %v682 = vsub.s32 4294967266, %v677
  %v683 = vadd.s32 %v682, 127
  %v684 = vshll.u32 %v683, 23
  %v685 = vor.u32 4788187, %v684
  %v686 = vand.u32 2147483647, %v685
  %v688 = vcvt.s32.f32 %v681
  %v689 = vmul.f32 %v688, %v686
  %v690 = vxor.u32 %v689, 2147483648
  %v691 = vsel %vm608, %v690, %v689
  %v692 = vsub.s32 4, %v668
  %v693 = vsel %vm608, %v692, %v668
  %v694 = vsel %vm607, %v83, %v691
  %v695 = vsel %vm607, 0, %v693
  %v696 = vcosq.f32.pop %v694
  %v697 = vsinq.f32.pop %v694
  %vm698 = vweird.f32 %v83
  %v699 = vadd.s32 %v695, 3
  %v700 = vand.u32 %v699, 3
  %vm701 = vcmp.lt.s32.totalorder %v700, 2
  %vm702 = vcmp.eq.s32.totalorder %v700, 0
  %v703 = vxor.u32 %v697, 2147483648
  %v704 = vsel %vm702, %v696, %v703
  %vm705 = vcmp.eq.s32.totalorder %v700, 2
  %v706 = vxor.u32 %v696, 2147483648
  %v707 = vsel %vm705, %v706, %v697
  %v708 = vsel %vm701, %v704, %v707
  %v709 = vsel %vm698, nan, %v708
  %v710 = vand.u32 2147483647, %v84
  %vm711 = vcmp.le.f32.partialorder %v710, 0.7853982
  %vm712 = vcmp.lt.s32.totalorder %v84, 0
  %v713 = vand.u32 %v84, 2139095040
  %v714 = vshrl.u32 %v713, 23
  %v715 = vsub.s32 %v714, 127
  %v716 = vand.u32 2147483647, %v84
  %v717 = vand.u32 %v716, 8388607
  %v718 = vor.u32 %v717, 8388608
  %v719 = vsub.s32 0, %v718
  %v720 = vadd.s32 %v715, 1
  %vm721 = vcmp.gt.s32.totalorder %v720, 0
  %v722 = vsel %vm721, %v720, 0
  %v723 = vshrl.u32 %v722, 5
  %v724 = vand.u32 %v722, 31
  %v725 = vsub.s32 32, %v724
  %v726 = vshrl.u32 683565275, %v725
  %v727 = vshll.u32 683565275, %v724
  %v728 = vshrl.u32 2475754826, %v725
  %v729 = vor.u32 %v727, %v728
  %v730 = vshll.u32 2475754826, %v724
  %v731 = vshrl.u32 2131351028, %v725
  %v732 = vor.u32 %v730, %v731
  %v733 = vshll.u32 2131351028, %v724
  %v734 = vshrl.u32 2102212464, %v725
  %v735 = vor.u32 %v733, %v734
  %v736 = vshll.u32 2102212464, %v724
  %v737 = vshrl.u32 920167782, %v725
  %v738 = vor.u32 %v736, %v737
  %v739 = vshll.u32 920167782, %v724
  %v740 = vshrl.u32 1326507024, %v725
  %v741 = vor.u32 %v739, %v740
  %vm742 = vcmp.lt.s32.totalorder %v723, 1
  %vm743 = vcmp.lt.s32.totalorder %v723, 2
  %vm744 = vcmp.lt.s32.totalorder %v723, 3
  %vm745 = vcmp.lt.s32.totalorder %v723, 4
  %v746 = vsel %vm742, %v726, %v729
  %v747 = vsel %vm745, %v735, 2102212464
  %v748 = vsel %vm744, %v732, %v747
  %v749 = vsel %vm743, %v746, %v748
  %v750 = vsel %vm742, %v729, %v732
  %v751 = vsel %vm745, %v738, 920167782
  %v752 = vsel %vm744, %v735, %v751
  %v753 = vsel %vm743, %v750, %v752
  %v754 = vsel %vm742, %v732, %v735
  %v755 = vsel %vm745, %v741, 1326507024
  %v756 = vsel %vm744, %v738, %v755
  %v757 = vsel %vm743, %v754, %v756
  %v758 = vshll.u32 %v718, 8
  %v759 = vmul.u32.u64.compose %v758, %v757
  %v760 = vextract.low.u32 %v759
  %v761 = vextract.high.u32 %v759
  %v762 = vmul.u32.u64.compose %v758, %v753
  %v763 = vextract.low.u32 %v762
  %v764 = vextract.high.u32 %v762
  %v765 = vmul.u32 %v758, %v749
  %v766 = vadd.s32 %v761, %v763
  %vm767 = vc.u32 %v761, %v763
  %v768 = vadd.s32 %v764, 1
  %v769 = vsel %vm767, %v768, %v764
  %v770 = vadd.s32 %v765, %v769
  %v771 = vadd.s32 %v770, 536870912
  %v772 = vshrl.u32 %v771, 30
  %v773 = vshll.u32 %v772, 30
  %v774 = vsub.s32 %v770, %v773
  %vm775 = vcmp.lt.s32.totalorder %v774, 0
  %v776 = vsub.s32 0, %v774
  %v777 = vsel %vm775, %v776, %v774
  %v778 = vclz %v777
  %v779 = vsub.s32 %v778, 2
  %vm780 = vcmp.gt.s32.totalorder 0, %v779
  %v781 = vsel %vm780, 0, %v779
  %v782 = vsub.s32 32, %v781
  %v783 = vshll.u32 %v774, %v781
  %v784 = vshrl.u32 %v766, %v782
  %v785 = vor.u32 %v783, %v784
  %v786 = vsub.s32 4294967266, %v781
  %v787 = vadd.s32 %v786, 127
  %v788 = vshll.u32 %v787, 23
  %v789 = vor.u32 4788187, %v788
  %v790 = vand.u32 2147483647, %v789
  %v792 = vcvt.s32.f32 %v785
  %v793 = vmul.f32 %v792, %v790
  %v794 = vxor.u32 %v793, 2147483648
  %v795 = vsel %vm712, %v794, %v793
  %v796 = vsub.s32 4, %v772
  %v797 = vsel %vm712, %v796, %v772
  %v798 = vsel %vm711, %v84, %v795
  %v799 = vsel %vm711, 0, %v797
  %v800 = vcosq.f32.pop %v798
  %v801 = vsinq.f32.pop %v798
  %vm802 = vweird.f32 %v84
  %v803 = vadd.s32 %v799, 3
  %v804 = vand.u32 %v803, 3
  %vm805 = vcmp.lt.s32.totalorder %v804, 2
  %vm806 = vcmp.eq.s32.totalorder %v804, 0
  %v807 = vxor.u32 %v801, 2147483648
  %v808 = vsel %vm806, %v800, %v807
  %vm809 = vcmp.eq.s32.totalorder %v804, 2
  %v810 = vxor.u32 %v800, 2147483648
  %v811 = vsel %vm809, %v810, %v801
  %v812 = vsel %vm805, %v808, %v811
  %v813 = vsel %vm802, nan, %v812
  %v814 = vand.u32 2147483647, %v85
  %vm815 = vcmp.le.f32.partialorder %v814, 0.7853982
  %vm816 = vcmp.lt.s32.totalorder %v85, 0
  %v817 = vand.u32 %v85, 2139095040
  %v818 = vshrl.u32 %v817, 23
  %v819 = vsub.s32 %v818, 127
  %v820 = vand.u32 2147483647, %v85
  %v821 = vand.u32 %v820, 8388607
  %v822 = vor.u32 %v821, 8388608
  %v823 = vsub.s32 0, %v822
  %v824 = vadd.s32 %v819, 1
  %vm825 = vcmp.gt.s32.totalorder %v824, 0
  %v826 = vsel %vm825, %v824, 0
  %v827 = vshrl.u32 %v826, 5
  %v828 = vand.u32 %v826, 31
  %v829 = vsub.s32 32, %v828
  %v830 = vshrl.u32 683565275, %v829
  %v831 = vshll.u32 683565275, %v828
  %v832 = vshrl.u32 2475754826, %v829
  %v833 = vor.u32 %v831, %v832
  %v834 = vshll.u32 2475754826, %v828
  %v835 = vshrl.u32 2131351028, %v829
  %v836 = vor.u32 %v834, %v835
  %v837 = vshll.u32 2131351028, %v828
  %v838 = vshrl.u32 2102212464, %v829
  %v839 = vor.u32 %v837, %v838
  %v840 = vshll.u32 2102212464, %v828
  %v841 = vshrl.u32 920167782, %v829
  %v842 = vor.u32 %v840, %v841
  %v843 = vshll.u32 920167782, %v828
  %v844 = vshrl.u32 1326507024, %v829
  %v845 = vor.u32 %v843, %v844
  %vm846 = vcmp.lt.s32.totalorder %v827, 1
  %vm847 = vcmp.lt.s32.totalorder %v827, 2
  %vm848 = vcmp.lt.s32.totalorder %v827, 3
  %vm849 = vcmp.lt.s32.totalorder %v827, 4
  %v850 = vsel %vm846, %v830, %v833
  %v851 = vsel %vm849, %v839, 2102212464
  %v852 = vsel %vm848, %v836, %v851
  %v853 = vsel %vm847, %v850, %v852
  %v854 = vsel %vm846, %v833, %v836
  %v855 = vsel %vm849, %v842, 920167782
  %v856 = vsel %vm848, %v839, %v855
  %v857 = vsel %vm847, %v854, %v856
  %v858 = vsel %vm846, %v836, %v839
  %v859 = vsel %vm849, %v845, 1326507024
  %v860 = vsel %vm848, %v842, %v859
  %v861 = vsel %vm847, %v858, %v860
  %v862 = vshll.u32 %v822, 8
  %v863 = vmul.u32.u64.compose %v862, %v861
  %v864 = vextract.low.u32 %v863
  %v865 = vextract.high.u32 %v863
  %v866 = vmul.u32.u64.compose %v862, %v857
  %v867 = vextract.low.u32 %v866
  %v868 = vextract.high.u32 %v866
  %v869 = vmul.u32 %v862, %v853
  %v870 = vadd.s32 %v865, %v867
  %vm871 = vc.u32 %v865, %v867
  %v872 = vadd.s32 %v868, 1
  %v873 = vsel %vm871, %v872, %v868
  %v874 = vadd.s32 %v869, %v873
  %v875 = vadd.s32 %v874, 536870912
  %v876 = vshrl.u32 %v875, 30
  %v877 = vshll.u32 %v876, 30
  %v878 = vsub.s32 %v874, %v877
  %vm879 = vcmp.lt.s32.totalorder %v878, 0
  %v880 = vsub.s32 0, %v878
  %v881 = vsel %vm879, %v880, %v878
  %v882 = vclz %v881
  %v883 = vsub.s32 %v882, 2
  %vm884 = vcmp.gt.s32.totalorder 0, %v883
  %v885 = vsel %vm884, 0, %v883
  %v886 = vsub.s32 32, %v885
  %v887 = vshll.u32 %v878, %v885
  %v888 = vshrl.u32 %v870, %v886
  %v889 = vor.u32 %v887, %v888
  %v890 = vsub.s32 4294967266, %v885
  %v891 = vadd.s32 %v890, 127
  %v892 = vshll.u32 %v891, 23
  %v893 = vor.u32 4788187, %v892
  %v894 = vand.u32 2147483647, %v893
  %v896 = vcvt.s32.f32 %v889
  %v897 = vmul.f32 %v896, %v894
  %v898 = vxor.u32 %v897, 2147483648
  %v899 = vsel %vm816, %v898, %v897
  %v900 = vsub.s32 4, %v876
  %v901 = vsel %vm816, %v900, %v876
  %v902 = vsel %vm815, %v85, %v899
  %v903 = vsel %vm815, 0, %v901
  %v904 = vcosq.f32.pop %v902
  %v905 = vsinq.f32.pop %v902
  %vm906 = vweird.f32 %v85
  %v907 = vadd.s32 %v903, 3
  %v908 = vand.u32 %v907, 3
  %vm909 = vcmp.lt.s32.totalorder %v908, 2
  %vm910 = vcmp.eq.s32.totalorder %v908, 0
  %v911 = vxor.u32 %v905, 2147483648
  %v912 = vsel %vm910, %v904, %v911
  %vm913 = vcmp.eq.s32.totalorder %v908, 2
  %v914 = vxor.u32 %v904, 2147483648
  %v915 = vsel %vm913, %v914, %v905
  %v916 = vsel %vm909, %v912, %v915
  %v917 = vsel %vm906, nan, %v916
  %918 = vst [vmem:[%s3] sm:$0xff] %v189
  %919 = vst [vmem:[%s3 + $0x8] sm:$0xff] %v293
  %920 = vst [vmem:[%s3 + $0x10] sm:$0xff] %v397
  %921 = vst [vmem:[%s3 + $0x18] sm:$0xff] %v501
  %922 = vst [vmem:[%s3 + $0x20] sm:$0xff] %v605
  %923 = vst [vmem:[%s3 + $0x28] sm:$0xff] %v709
  %924 = vst [vmem:[%s3 + $0x30] sm:$0xff] %v813
  %925 = vst [vmem:[%s3 + $0x38] sm:$0xff] %v917
  // Predicated region
  $region14: #{positional_embedder.1} parent=0 // pred_check
    _
  $region15: #{positional_embedder.1} parent=0 // pred_check_branch
    %927 = sbr.rel (0) target = $region17
  $region16: #{positional_embedder.1} parent=0 // pred_region
    _
  $region17: #{positional_embedder.1} parent=0 // pred_fallthru
    _
  // Predicated region
  $region18: #{positional_embedder.1} parent=0 // pred_check
    _
  $region19: #{positional_embedder.1} parent=0 // pred_check_branch
    %929 = sbr.rel (0) target = $region21
  $region20: #{positional_embedder.1} parent=0 // pred_region
    _
  $region21: #{positional_embedder.1} parent=0 // pred_fallthru
    _

</llo_original>
